<compile_context>
chip_gen: v5e
topology: v5e:2x2
jax: 0.10.0
libtpu: 0.0.40
codegen_flags: <defaults>
</compile_context>

<pallas_src>
import functools

import jax
import jax.numpy as jnp
from jax.experimental import pallas as pl
from jax.experimental.pallas import tpu as pltpu


def _softmax_attend(enc, dec):
    """Shared math: transposed scores, softmax over L_dec, weighted sum of enc.

    enc: (TB, TL, Hp) bf16/f32, dec: (TB, L_dec, Hp) bf16/f32.
    Returns f32 (TB, L_dec, Hp).
    """
    # Transposed scores, no explicit .T:
    #   sT[b, d, e] = sum_h dec[b, d, h] * enc[b, e, h]  (== s_t[b, e, d])
    sT = jnp.einsum("bdh,beh->bde", dec, enc,
                    preferred_element_type=jnp.float32)

    # Reference softmax is over L_dec (last axis of s_t) == axis 1 of sT.
    m = jnp.max(sT, axis=1, keepdims=True)
    p = jnp.exp(sT - m)
    inv = pl.reciprocal(jnp.sum(p, axis=1, keepdims=True), approx=True)
    a = (p * inv).astype(enc.dtype)               # == a_t.permute(0, 2, 1)

    # out[b, d, h] = sum_e a[b, d, e] * enc[b, e, h]
    return jnp.einsum("bde,beh->bdh", a, enc,
                      preferred_element_type=jnp.float32)


def _attention_kernel_single(enc_ref, dec_ref, out_ref, *, compute_dtype):
    # Whole L_enc fits in one block: write the output directly.
    enc = enc_ref[...].astype(compute_dtype)
    dec = dec_ref[...].astype(compute_dtype)
    out_ref[...] = _softmax_attend(enc, dec).astype(out_ref.dtype)


def _attention_kernel_tiled(enc_ref, dec_ref, out_ref, acc_ref, *,
                            compute_dtype):
    # enc_ref: (TB, TL, Hp)     current L_enc tile of encoder outputs
    # dec_ref: (TB, L_dec, Hp)  decoder outputs (same block across the k axis)
    # out_ref: (TB, L_dec, Hp)  output (resident across the k axis)
    # acc_ref: (TB, L_dec, Hp)  f32 accumulator scratch
    k = pl.program_id(1)

    @pl.when(k == 0)
    def _init():
        acc_ref[...] = jnp.zeros_like(acc_ref)

    enc = enc_ref[...].astype(compute_dtype)
    dec = dec_ref[...].astype(compute_dtype)
    acc_ref[...] += _softmax_attend(enc, dec)

    @pl.when(k == pl.num_programs(1) - 1)
    def _finalize():
        out_ref[...] = acc_ref[...].astype(out_ref.dtype)


def _pick_tb(B, TL, L_dec, Hp, in_bytes):
    """Largest divisor of B whose blocks fit a conservative VMEM budget."""
    budget = 20 * 1024 * 1024          # headroom under the 32 MiB scoped limit
    best = 1
    for tb in range(1, min(B, 16) + 1):
        if B % tb:
            continue
        vmem = (
            2 * tb * TL * Hp * in_bytes        # enc blocks (double-buffered)
            + 2 * tb * L_dec * Hp * in_bytes   # dec blocks
            + 2 * tb * L_dec * Hp * in_bytes   # out blocks
            + tb * L_dec * Hp * 4              # f32 accumulator scratch
            + 2 * tb * L_dec * TL * 4          # score / prob intermediates
        )
        if vmem <= budget:
            best = tb
    return best


def attention(enc_outputs: jax.Array, dec_outputs: jax.Array, *,
              compute_dtype=jnp.bfloat16, max_tl: int = 512,
              vmem_limit_bytes: int = 32 * 1024 * 1024) -> jax.Array:
    """enc_outputs: (B, L_enc, H); dec_outputs: (B, L_dec, H) -> (B, L_dec, H)."""
    B, L_enc, H = enc_outputs.shape
    Bd, L_dec, Hd = dec_outputs.shape
    assert B == Bd and H == Hd
    out_dtype = enc_outputs.dtype

    # Lane-dense hidden dim: pad H to a multiple of 128 (unmasked full-lane
    # stores). Zero columns add zero to the scores and give zero output
    # columns which are sliced away below.
    Hp = ((H + 127) // 128) * 128
    pad_h = Hp - H

    # L_enc tiling: whole sequence if it fits, otherwise fixed tiles that are
    # accumulated into the f32 scratch. Padded enc rows are all-zero, so they
    # contribute nothing to the output (their softmax weights multiply zero
    # rows).  L_dec is never padded: extra rows would change the softmax
    # normalization.
    if L_enc <= max_tl:
        TL = L_enc
        L_enc_p = L_enc
    else:
        TL = max_tl
        L_enc_p = ((L_enc + TL - 1) // TL) * TL

    if pad_h or L_enc_p != L_enc:
        enc_outputs = jnp.pad(
            enc_outputs, ((0, 0), (0, L_enc_p - L_enc), (0, pad_h)))
    if pad_h:
        dec_outputs = jnp.pad(dec_outputs, ((0, 0), (0, 0), (0, pad_h)))

    TB = _pick_tb(B, TL, L_dec, Hp,
                  in_bytes=jnp.dtype(enc_outputs.dtype).itemsize)
    n_k = L_enc_p // TL

    if n_k == 1:
        # Single L_enc tile: no scratch accumulator, 1-D grid over batch.
        out_padded = pl.pallas_call(
            functools.partial(_attention_kernel_single,
                              compute_dtype=compute_dtype),
            out_shape=jax.ShapeDtypeStruct((B, L_dec, Hp), out_dtype),
            grid_spec=pltpu.PrefetchScalarGridSpec(
                num_scalar_prefetch=0,
                grid=(B // TB,),
                in_specs=[
                    pl.BlockSpec((TB, L_enc_p, Hp), lambda b: (b, 0, 0)),
                    pl.BlockSpec((TB, L_dec, Hp), lambda b: (b, 0, 0)),
                ],
                out_specs=pl.BlockSpec((TB, L_dec, Hp), lambda b: (b, 0, 0)),
            ),
            compiler_params=pltpu.CompilerParams(
                dimension_semantics=("parallel",),
                vmem_limit_bytes=vmem_limit_bytes,
            ),
        )(enc_outputs, dec_outputs)
    else:
        out_padded = pl.pallas_call(
            functools.partial(_attention_kernel_tiled,
                              compute_dtype=compute_dtype),
            out_shape=jax.ShapeDtypeStruct((B, L_dec, Hp), out_dtype),
            grid_spec=pltpu.PrefetchScalarGridSpec(
                num_scalar_prefetch=0,
                grid=(B // TB, n_k),
                in_specs=[
                    pl.BlockSpec((TB, TL, Hp), lambda b, k: (b, k, 0)),
                    pl.BlockSpec((TB, L_dec, Hp), lambda b, k: (b, 0, 0)),
                ],
                out_specs=pl.BlockSpec((TB, L_dec, Hp), lambda b, k: (b, 0, 0)),
                scratch_shapes=[pltpu.VMEM((TB, L_dec, Hp), jnp.float32)],
            ),
            compiler_params=pltpu.CompilerParams(
                dimension_semantics=("parallel", "arbitrary"),
                vmem_limit_bytes=vmem_limit_bytes,
            ),
        )(enc_outputs, dec_outputs)

    return out_padded[..., :H] if pad_h else out_padded


def _attention_ref(enc, dec):
    s = jnp.einsum("beh,bdh->bed", enc, dec)      # bmm(enc, dec^T)
    a = jax.nn.softmax(s, axis=-1)
    return jnp.einsum("bed,beh->bdh", a, enc)     # bmm(a^T, enc)


def _attention_ref_matched(enc, dec):
    # Mirrors the kernel's precision recipe (bf16 operands, f32 accumulation)
    # to check the kernel math tightly.
    enc_b = enc.astype(jnp.bfloat16)
    dec_b = dec.astype(jnp.bfloat16)
    s = jnp.einsum("beh,bdh->bed", enc_b, dec_b,
                   preferred_element_type=jnp.float32)
    a = jax.nn.softmax(s, axis=-1).astype(jnp.bfloat16)
    return jnp.einsum("bed,beh->bdh", a, enc_b,
                      preferred_element_type=jnp.float32)


if __name__ == "__main__":
    key = jax.random.PRNGKey(0)
    k1, k2 = jax.random.split(key)

    B, L_enc, L_dec, H = 2, 16, 8, 32
    enc = jax.random.normal(k1, (B, L_enc, H), dtype=jnp.float32)
    dec = jax.random.normal(k2, (B, L_dec, H), dtype=jnp.float32)

    out = attention(enc, dec)
    out = jax.block_until_ready(out)
    assert out.shape == (B, L_dec, H)

    out_f32 = out.astype(jnp.float32)

    # Tight check against a reference using the same bf16 operand rounding.
    ref_matched = _attention_ref_matched(enc, dec)
    assert jnp.allclose(out_f32, ref_matched, atol=2e-2, rtol=2e-2), (
        "mismatch vs precision-matched reference: "
        f"{jnp.max(jnp.abs(out_f32 - ref_matched))}")

    # Looser sanity check against the full-f32 reference (bf16 MXU operands).
    ref = _attention_ref(enc, dec)
    assert jnp.allclose(out_f32, ref, atol=2e-1, rtol=5e-2), (
        f"mismatch vs f32 reference: {jnp.max(jnp.abs(out_f32 - ref))}")

    print("KERNEL_OK")
</pallas_src>

<mosaic_0001>
module attributes {stable_mosaic.version = 11 : i64} {
  func.func @_attention_kernel_single(%arg0: i32, %arg1: memref<2x16x128xf32, #tpu.memory_space<vmem>>, %arg2: memref<2x8x128xf32, #tpu.memory_space<vmem>>, %arg3: memref<2x8x128xf32, #tpu.memory_space<vmem>>) attributes {dimension_semantics = [#tpu.dimension_semantics<parallel>], iteration_bounds = array<i64: 1>, scalar_prefetch = 0 : i64, scratch_operands = 0 : i64, tpu.core_type = #tpu.core_type<tc>, window_params = [{transform_indices = @transform_0, window_bounds = array<i64: 2, 16, 128>}, {transform_indices = @transform_1, window_bounds = array<i64: 2, 8, 128>}, {transform_indices = @transform_2, window_bounds = array<i64: 2, 8, 128>}]} {
    %c0 = arith.constant 0 : index
    %c0_0 = arith.constant 0 : index
    %c0_1 = arith.constant 0 : index
    %0 = vector.load %arg1[%c0, %c0_0, %c0_1] : memref<2x16x128xf32, #tpu.memory_space<vmem>>, vector<2x16x128xf32>
    %1 = arith.truncf %0 : vector<2x16x128xf32> to vector<2x16x128xbf16>
    %c0_2 = arith.constant 0 : index
    %c0_3 = arith.constant 0 : index
    %c0_4 = arith.constant 0 : index
    %2 = vector.load %arg2[%c0_2, %c0_3, %c0_4] : memref<2x8x128xf32, #tpu.memory_space<vmem>>, vector<2x8x128xf32>
    %3 = arith.truncf %2 : vector<2x8x128xf32> to vector<2x8x128xbf16>
    "tpu.trace_start"() <{level = 10 : i32, message = "bdh,beh->bde"}> : () -> ()
    %cst = arith.constant dense<0.000000e+00> : vector<2x8x16xf32>
    %4 = tpu.matmul %3, %1, %cst {dimension_numbers = #tpu.dot_dimension_numbers<[2], [2], [1], [1], [0, 0, 0, 1, 1, 1], [0], [0]>} : vector<2x8x128xbf16>, vector<2x16x128xbf16>, vector<2x8x16xf32> -> vector<2x8x16xf32>
    "tpu.trace_stop"() : () -> ()
    %cst_5 = arith.constant dense<0xFF800000> : vector<2x16xf32>
    %5 = vector.multi_reduction <maximumf>, %4, %cst_5 [1] : vector<2x8x16xf32> to vector<2x16xf32>
    %6 = vector.shape_cast %5 : vector<2x16xf32> to vector<2x1x16xf32>
    %7 = vector.broadcast %6 : vector<2x1x16xf32> to vector<2x8x16xf32>
    %8 = arith.subf %4, %7 : vector<2x8x16xf32>
    %9 = math.exp %8 : vector<2x8x16xf32>
    %cst_6 = arith.constant dense<0.000000e+00> : vector<2x16xf32>
    %10 = vector.multi_reduction <add>, %9, %cst_6 [1] : vector<2x8x16xf32> to vector<2x16xf32>
    %11 = vector.shape_cast %10 : vector<2x16xf32> to vector<2x1x16xf32>
    %12 = tpu.reciprocal %11 {approx = true} : vector<2x1x16xf32> -> vector<2x1x16xf32>
    %13 = vector.broadcast %12 : vector<2x1x16xf32> to vector<2x8x16xf32>
    %14 = arith.mulf %9, %13 : vector<2x8x16xf32>
    %15 = arith.truncf %14 : vector<2x8x16xf32> to vector<2x8x16xbf16>
    "tpu.trace_start"() <{level = 10 : i32, message = "bde,beh->bdh"}> : () -> ()
    %cst_7 = arith.constant dense<0.000000e+00> : vector<2x8x128xf32>
    %16 = tpu.matmul %15, %1, %cst_7 {dimension_numbers = #tpu.dot_dimension_numbers<[2], [1], [1], [2], [0, 0, 0, 1, 1, 2], [0], [0]>} : vector<2x8x16xbf16>, vector<2x16x128xbf16>, vector<2x8x128xf32> -> vector<2x8x128xf32>
    "tpu.trace_stop"() : () -> ()
    %c0_8 = arith.constant 0 : index
    %c0_9 = arith.constant 0 : index
    %c0_10 = arith.constant 0 : index
    %17 = vector.load %arg3[%c0_8, %c0_9, %c0_10] : memref<2x8x128xf32, #tpu.memory_space<vmem>>, vector<2x8x128xf32>
    tpu.vector_store %arg3[%c0_8, %c0_9, %c0_10], %16 {strides = array<i32>} : memref<2x8x128xf32, #tpu.memory_space<vmem>>, vector<2x8x128xf32>,
    return
  }
  func.func @transform_0(%arg0: i32) -> (i32, i32, i32) {
    %c0_i32 = arith.constant 0 : i32
    %c0_i32_0 = arith.constant 0 : i32
    %c0_i32_1 = arith.constant 0 : i32
    return %arg0, %c0_i32, %c0_i32_0 : i32, i32, i32
  }
  func.func @transform_1(%arg0: i32) -> (i32, i32, i32) {
    %c0_i32 = arith.constant 0 : i32
    %c0_i32_0 = arith.constant 0 : i32
    %c0_i32_1 = arith.constant 0 : i32
    return %arg0, %c0_i32, %c0_i32_0 : i32, i32, i32
  }
  func.func @transform_2(%arg0: i32) -> (i32, i32, i32) {
    %c0_i32 = arith.constant 0 : i32
    %c0_i32_0 = arith.constant 0 : i32
    %c0_i32_1 = arith.constant 0 : i32
    return %arg0, %c0_i32, %c0_i32_0 : i32, i32, i32
  }
}

</mosaic_0001>

<llo_original>
// kernel: tpu_custom_call.1
$region0: #{tpu_custom_call.1}
  #allocation0 [shape = 'u32[]', space=smem, size = 0x4, offset = 0x4, fixed_abs, tag = 'smem constant byte address 0x4 - core index']
  #allocation1 [shape = 'u32[72,128]{1,0:T(1,128)}', space=vmem, size = 0x9000, scoped, tag = 'internal scratch']
  %s0 = inlined_call_operand.hbm [shape: f32[2,16,128], index: 0, kind: input, shape index: {}]
  %s1 = inlined_call_operand.hbm [shape: f32[2,8,128], index: 1, kind: input, shape index: {}]
  %s2 = inlined_call_operand.hbm [shape: f32[2,8,128], index: 2, kind: output, shape index: {}]
  %s3 = sld [smem:[#allocation0]]
  $region26: #{tpu_custom_call.1} parent=0
    _
  %s5 = ssub.s32 1, %s3
  %s6 = scalar_select 0, %s5, %s3
  $region1: #{tpu_custom_call.1} parent=0
    #allocation2 [shape = 'u8[16384]{0}', space=vmem, size = 0x4000, scoped, tag = 'input window, operand 0, single buffered']
    #allocation3 [shape = 's32[1]{0}', space=sflag, size = 0x4, scoped, tag = 'scoped memory for tpu_custom_call.1']
    #allocation4 [shape = 's32[1]{0}', space=sflag, size = 0x4, scoped, tag = 'scoped memory for tpu_custom_call.1']
    #allocation5 [shape = 'u8[8192]{0}', space=vmem, size = 0x2000, scoped, tag = 'input window, operand 1, single buffered']
    #allocation6 [shape = 's32[1]{0}', space=sflag, size = 0x4, scoped, tag = 'scoped memory for tpu_custom_call.1']
    #allocation7 [shape = 'u8[8192]{0}', space=vmem, size = 0x2000, scoped, tag = 'output window, operand 0, single buffered']
    %7 = vsyncpa [#allocation3], 0
    %8 = vsyncpa [#allocation6], 0
    %9 = vsyncpa [#allocation4], 0
    // Predicated region
    $region2: #{tpu_custom_call.1} parent=1 // pred_check
      _
    $region3: #{tpu_custom_call.1} parent=1 // pred_check_branch
      %11 = sbr.rel (0) target = $region5
    $region4: #{tpu_custom_call.1} parent=1 // pred_region
      %13 = vsyncadd [#allocation3], 0
      %s14 = sshll.u32 %s0, 4
      %s15 = int_to_ptr.hbm [resolvable:$true] %s14
      %s16 = sshll.u32 [#allocation2], 4
      %s17 = int_to_ptr.vmem [resolvable:$true] %s16
      %22 = dma.hbm_to_vmem [thread:$0]  %s15, 512, %s17, [#allocation3], 128, 128, 8
    $region5: #{tpu_custom_call.1} parent=1 // pred_fallthru
      _
    // Predicated region
    $region6: #{tpu_custom_call.1} parent=1 // pred_check
      _
    $region7: #{tpu_custom_call.1} parent=1 // pred_check_branch
      %24 = sbr.rel (0) target = $region9
    $region8: #{tpu_custom_call.1} parent=1 // pred_region
      %26 = vsyncadd [#allocation6], 0
      %s27 = sshll.u32 %s1, 4
      %s28 = int_to_ptr.hbm [resolvable:$true] %s27
      %s29 = sshll.u32 [#allocation5], 4
      %s30 = int_to_ptr.vmem [resolvable:$true] %s29
      %35 = dma.hbm_to_vmem [thread:$0]  %s28, 256, %s30, [#allocation6], 128, 128, 8
    $region9: #{tpu_custom_call.1} parent=1 // pred_fallthru
      _
    // Predicated region
    $region10: #{tpu_custom_call.1} parent=1 // pred_check
      _
    $region11: #{tpu_custom_call.1} parent=1 // pred_check_branch
      %37 = sbr.rel (0) target = $region13
    $region12: #{tpu_custom_call.1} parent=1 // pred_region
      %39 = dma.done [#allocation3], 512
    $region13: #{tpu_custom_call.1} parent=1 // pred_fallthru
      _
    // Predicated region
    $region14: #{tpu_custom_call.1} parent=1 // pred_check
      _
    $region15: #{tpu_custom_call.1} parent=1 // pred_check_branch
      %41 = sbr.rel (0) target = $region17
    $region16: #{tpu_custom_call.1} parent=1 // pred_region
      %43 = dma.done [#allocation6], 256
    $region17: #{tpu_custom_call.1} parent=1 // pred_fallthru
      _
    %v45 = vld [vmem:[#allocation2] sm:$0xff]
    %v46 = vld [vmem:[#allocation2 + $0x8] sm:$0xff]
    %v47 = vld [vmem:[#allocation2 + $0x10] sm:$0xff]
    %v48 = vld [vmem:[#allocation2 + $0x18] sm:$0xff]
    %v49 = vpack.c.bf16 %v45, %v45
    %v50 = vpack.c.bf16 %v46, %v46
    %v51 = vpack.c.bf16 %v47, %v47
    %v52 = vpack.c.bf16 %v48, %v48
    %v53 = vld [vmem:[#allocation5] sm:$0xff]
    %v54 = vld [vmem:[#allocation5 + $0x8] sm:$0xff]
    %v55 = vpack.c.bf16 %v53, %v53
    %v56 = vpack.c.bf16 %v54, %v54
    %v59 = vunpack.c.l.b16 %v49
    %v60 = vunpack.c.l.b16 %v50
    %v61 = vpack.c.b16 %v60, %v59
    %63 = vmatpush.bf16.xpose.msra.mxu0 0
    %64 = vmatpush.bf16.xpose.msra.mxu0 0
    %65 = vmatpush.bf16.xpose.msra.mxu0 0
    %66 = vmatpush.bf16.xpose.msra.mxu0 0
    %67 = vmatpush.bf16.xpose.msra.mxu0 0
    %68 = vmatpush.bf16.xpose.msra.mxu0 0
    %69 = vmatpush.bf16.xpose.msra.mxu0 0
    %70 = vmatpush.bf16.xpose.msra.mxu0 %v61
    %71 = vmatmul.bf16.gmra.mxu0 %v55
    %v72 = vpop.f32.mrf.mxu0
    %v73 = vadd.f32 0.0, %v72
    %v74 = vpop.f32.mrf.mxu0
    %75 = vdwg.mxu0
    %v78 = vunpack.c.l.b16 %v51
    %v79 = vunpack.c.l.b16 %v52
    %v80 = vpack.c.b16 %v79, %v78
    %82 = vmatpush.bf16.xpose.msra.mxu0 0
    %83 = vmatpush.bf16.xpose.msra.mxu0 0
    %84 = vmatpush.bf16.xpose.msra.mxu0 0
    %85 = vmatpush.bf16.xpose.msra.mxu0 0
    %86 = vmatpush.bf16.xpose.msra.mxu0 0
    %87 = vmatpush.bf16.xpose.msra.mxu0 0
    %88 = vmatpush.bf16.xpose.msra.mxu0 0
    %89 = vmatpush.bf16.xpose.msra.mxu0 %v80
    %90 = vmatmul.bf16.gmra.mxu0 %v56
    %v91 = vpop.f32.mrf.mxu0
    %v92 = vadd.f32 0.0, %v91
    %v93 = vpop.f32.mrf.mxu0
    %94 = vdwg.mxu0
    %vm95 = vcmask 130048
    %v96 = vsel %vm95, %v73, -inf
    %v97 = vrot.slane %v96, 4
    %v98 = vmax.f32 %v96, %v97
    %v99 = vrot.slane %v98, 2
    %v100 = vmax.f32 %v98, %v99
    %v101 = vrot.slane %v100, 1
    %v102 = vmax.f32 %v100, %v101
    %v103 = vsel %vm95, %v92, -inf
    %v104 = vrot.slane %v103, 4
    %v105 = vmax.f32 %v103, %v104
    %v106 = vrot.slane %v105, 2
    %v107 = vmax.f32 %v105, %v106
    %v108 = vrot.slane %v107, 1
    %v109 = vmax.f32 %v107, %v108
    %v110 = vsub.f32 %v73, %v102
    %v111 = vsub.f32 %v92, %v109
    %v112 = vmul.f32 %v110, 1.442695
    %v113 = vpow.pop %v112
    %v114 = vmul.f32 %v111, 1.442695
    %v115 = vpow.pop %v114
    %v116 = vsel %vm95, %v113, 0.0
    %v117 = vrot.slane %v116, 4
    %v118 = vadd.f32 %v116, %v117
    %v119 = vrot.slane %v118, 2
    %v120 = vadd.f32 %v118, %v119
    %v121 = vrot.slane %v120, 1
    %v122 = vadd.f32 %v120, %v121
    %v123 = vsel %vm95, %v115, 0.0
    %v124 = vrot.slane %v123, 4
    %v125 = vadd.f32 %v123, %v124
    %v126 = vrot.slane %v125, 2
    %v127 = vadd.f32 %v125, %v126
    %v128 = vrot.slane %v127, 1
    %v129 = vadd.f32 %v127, %v128
    %v130 = vrcp.pop %v122
    %v131 = vrcp.pop %v129
    %v132 = vmul.f32 %v113, %v130
    %v133 = vmul.f32 %v115, %v131
    %v134 = vpack.c.bf16 %v132, %v132
    %v135 = vpack.c.bf16 %v133, %v133
    %v137 = vsel %vm95, %v134, 0
    %139 = vmatpush.bf16.msra.mxu0 0
    %140 = vmatpush.bf16.msra.mxu0 0
    %141 = vmatpush.bf16.msra.mxu0 0
    %142 = vmatpush.bf16.msra.mxu0 0
    %143 = vmatpush.bf16.msra.mxu0 0
    %144 = vmatpush.bf16.msra.mxu0 0
    %145 = vmatpush.bf16.msra.mxu0 0
    %146 = vmatpush.bf16.msra.mxu0 %v61
    %147 = vmatmul.bf16.gmra.mxu0 %v137
    %v148 = vpop.f32.mrf.mxu0
    %v149 = vadd.f32 0.0, %v148
    %v150 = vpop.f32.mrf.mxu0
    %151 = vdwg.mxu0
    %v153 = vsel %vm95, %v135, 0
    %155 = vmatpush.bf16.msra.mxu0 0
    %156 = vmatpush.bf16.msra.mxu0 0
    %157 = vmatpush.bf16.msra.mxu0 0
    %158 = vmatpush.bf16.msra.mxu0 0
    %159 = vmatpush.bf16.msra.mxu0 0
    %160 = vmatpush.bf16.msra.mxu0 0
    %161 = vmatpush.bf16.msra.mxu0 0
    %162 = vmatpush.bf16.msra.mxu0 %v80
    %163 = vmatmul.bf16.gmra.mxu0 %v153
    %v164 = vpop.f32.mrf.mxu0
    %v165 = vadd.f32 0.0, %v164
    %v166 = vpop.f32.mrf.mxu0
    %167 = vdwg.mxu0
    %168 = vst [vmem:[#allocation7] sm:$0xff] %v149
    %169 = vst [vmem:[#allocation7 + $0x8] sm:$0xff] %v165
    // Predicated region
    $region18: #{tpu_custom_call.1} parent=1 // pred_check
      _
    $region19: #{tpu_custom_call.1} parent=1 // pred_check_branch
      %171 = sbr.rel (0) target = $region21
    $region20: #{tpu_custom_call.1} parent=1 // pred_region
      %173 = vsyncadd [#allocation4], 0
      %s174 = sshll.u32 [#allocation7], 4
      %s175 = int_to_ptr.vmem [resolvable:$true] %s174
      %s176 = sshll.u32 %s2, 4
      %s177 = int_to_ptr.hbm [resolvable:$true] %s176
      %182 = dma.vmem_to_hbm [thread:$0]  %s175, 256, %s177, [#allocation4], 128, 128, 8
    $region21: #{tpu_custom_call.1} parent=1 // pred_fallthru
      _
    // Predicated region
    $region22: #{tpu_custom_call.1} parent=1 // pred_check
      _
    $region23: #{tpu_custom_call.1} parent=1 // pred_check_branch
      %184 = sbr.rel (0) target = $region25
    $region24: #{tpu_custom_call.1} parent=1 // pred_region
      %186 = dma.done [#allocation4], 256
    $region25: #{tpu_custom_call.1} parent=1 // pred_fallthru
      _
    %187 = vsyncpa [#allocation3], 1
    %188 = vsyncpa [#allocation6], 1
    %189 = vsyncpa [#allocation4], 1

</llo_original>
